<compile_context>
chip_gen: v5e
topology: v5e:2x2
jax: 0.10.0
libtpu: 0.0.40
codegen_flags: <defaults>
</compile_context>

<pallas_src>
import functools

import jax
import jax.numpy as jnp
from jax.experimental import pallas as pl
from jax.experimental.pallas import tpu as pltpu


def bsm_loss_kernel(x_ref, tgt_ref, cwc_ref, rowc_ref, out_ref, tmax_ref, *, batch):
    """One (TM, C) row tile of the fused BSM loss.

    x_ref    : (TM, C) logits tile (native dtype, streamed)
    tgt_ref  : (TM, 1) int32  targets for these rows
    cwc_ref  : (TM, 1) f32    2 * class_weights[target]
    rowc_ref : (TM, 1) f32    cw[target]*(log(lw[target[target]]) - log(lw[target]))
    out_ref  : (TM, 1) f32    per-row partial loss (global-max term applied in wrapper)
    tmax_ref : (TM, 1) f32    tile max of the logits, broadcast over the rows
    """
    x = x_ref[...]                                   # (TM, C), native dtype
    tm, num_classes = x.shape

    # Fused "gather column target[i] of row i": compare + select + lane reduce.
    lane = jax.lax.broadcasted_iota(jnp.int32, (tm, num_classes), 1)
    pred = tgt_ref[...] == lane                      # (TM, C) one-hot predicate
    # Exactly one nonzero per row -> native-dtype sum is exact; only the (TM,1)
    # selected column is upcast to f32.
    xsel = jnp.sum(jnp.where(pred, x, jnp.array(0, dtype=x.dtype)),
                   axis=-1, keepdims=True).astype(jnp.float32)

    out_ref[...] = cwc_ref[...] * xsel - rowc_ref[...]

    # Per-tile max for the global-max correction.  For a padded tail tile the
    # out-of-range rows hold unspecified data, so mask them out (static check:
    # zero cost when the batch divides the tile).
    if batch % tm != 0:
        row = pl.program_id(0) * tm + jax.lax.broadcasted_iota(
            jnp.int32, (tm, num_classes), 0)
        x = jnp.where(row < batch, x, jnp.array(-jnp.inf, dtype=x.dtype))
    tile_max = jnp.max(x).astype(jnp.float32)
    tmax_ref[...] = jnp.broadcast_to(tile_max, tmax_ref.shape)


def _vmem_capacity_bytes():
    try:
        return int(pltpu.get_tpu_info().vmem_capacity_bytes)
    except Exception:
        return 64 * 1024 * 1024          # conservative (v7x-sized) fallback


def _vmem_limit_bytes():
    # <= 48 MiB on a 64-MiB-VMEM core (v7x), 64 MiB on 128-MiB cores (v5e/v6e).
    return min(64 * 1024 * 1024, (_vmem_capacity_bytes() * 3) // 4)


def _choose_row_tile(batch, num_classes, itemsize, requested):
    """Row-tile size + grid length.

    Aligns to the dtype's sublane packing, keeps the double-buffered logits tile
    within a per-buffer budget derived from VMEM capacity, keeps >= 2 tiles so
    the parallel row axis can shard across both v7x TensorCores, and allows a
    padded tail tile instead of falling back to one giant block.
    """
    align = max(8, 32 // max(1, itemsize))           # 8 f32 / 16 bf16 / 32 int8
    vmem_cap = _vmem_capacity_bytes()
    budget_bytes = (12 * 1024 * 1024 if vmem_cap <= 64 * 1024 * 1024
                    else 16 * 1024 * 1024)
    budget_rows = max(align, budget_bytes // max(1, num_classes * itemsize))

    if batch <= align:
        return batch, 1                              # full-array block is legal

    tm = min(requested, budget_rows, batch)
    tm = min(tm, max(align, batch // 2))             # >= 2 tiles (v7x megacore)
    tm = max(align, tm - tm % align)
    grid = pl.cdiv(batch, tm)                        # padded tail tile allowed
    return tm, grid


def bsm_loss(logits, target, loss_weights, class_weights, *, tm=1024):
    batch, num_classes = logits.shape
    assert batch == num_classes, (
        "torch reference broadcast (B,B)-(B,C) requires B == C")

    tm, grid_rows = _choose_row_tile(batch, num_classes,
                                     logits.dtype.itemsize, tm)

    tgt = target.astype(jnp.int32)
    tgt_col = tgt.reshape(batch, 1)

    # One-time O(B) gathers / logs (hoisted out of the grid loop).
    lw = loss_weights.astype(jnp.float32)
    cw_t = class_weights.astype(jnp.float32)[tgt]                    # cw[t_i]
    cwc = 2.0 * cw_t                                                 # (B,)
    rowc = cw_t * (jnp.log(lw[tgt[tgt]]) - jnp.log(lw[tgt]))         # (B,)
    cwc_col = cwc.reshape(batch, 1)
    rowc_col = rowc.reshape(batch, 1)

    kernel = functools.partial(bsm_loss_kernel, batch=batch)

    partial, tile_max_rows = pl.pallas_call(
        kernel,
        out_shape=(jax.ShapeDtypeStruct((batch, 1), jnp.float32),
                   jax.ShapeDtypeStruct((batch, 1), jnp.float32)),
        grid=(grid_rows,),
        in_specs=[
            pl.BlockSpec((tm, num_classes), lambda i: (i, 0)),   # logits row tile
            pl.BlockSpec((tm, 1), lambda i: (i, 0)),             # target rows
            pl.BlockSpec((tm, 1), lambda i: (i, 0)),             # 2*cw[target]
            pl.BlockSpec((tm, 1), lambda i: (i, 0)),             # rowc column
        ],
        out_specs=(pl.BlockSpec((tm, 1), lambda i: (i, 0)),      # partial loss
                   pl.BlockSpec((tm, 1), lambda i: (i, 0))),     # tile max rows
        compiler_params=pltpu.CompilerParams(
            dimension_semantics=("parallel",),
            vmem_limit_bytes=_vmem_limit_bytes(),
        ),
    )(logits, tgt_col, cwc_col, rowc_col)

    # Global-max correction: c only enters as an additive -2*cw[target]*c term,
    # so apply it here on a (B,) vector (tiny epilogue, no second logits read).
    c = jnp.max(tile_max_rows)
    return partial.reshape(batch) - cwc * c


def bsm_loss_ref(logits, target, loss_weights, class_weights):
    """Pure-JAX literal replica of the torch module, for correctness checking."""
    c = jnp.max(logits)
    diff = logits - c
    target_weight = loss_weights[target]
    logsumexp = jnp.log(loss_weights * jnp.exp(diff))          # elementwise, no sum
    log_probs = (jnp.log(target_weight)[None, :].repeat(logits.shape[0], axis=0)
                 - diff - logsumexp)                           # (B, B)
    sel = log_probs[:, target]                                 # index_select(-1, target)
    diag = jnp.diagonal(sel)                                   # [i, target[i]]
    return -class_weights[target] * diag


if __name__ == "__main__":
    B = C = 128   # torch broadcast requires batch == num_classes

    key = jax.random.PRNGKey(0)
    k1, k2, k3 = jax.random.split(key, 3)
    logits = jax.random.normal(k1, (B, C), dtype=jnp.float32)
    target = jax.random.randint(k2, (B,), 0, C, dtype=jnp.int32)
    loss_weights = jax.random.uniform(k3, (C,), minval=0.1, maxval=1.0,
                                      dtype=jnp.float32)
    # deterministic stand-in for the (undefined-in-torch) class_weights param
    class_weights = jnp.linspace(0.5, 1.5, C, dtype=jnp.float32)

    # tm=32 -> 4 row tiles, exercising the pipelined grid path.
    out = bsm_loss(logits, target, loss_weights, class_weights, tm=32)
    out = jax.block_until_ready(out)

    ref = bsm_loss_ref(logits, target, loss_weights, class_weights)
    assert out.shape == (B,)
    assert jnp.allclose(out, ref, rtol=1e-5, atol=5e-5), (out, ref)

    print("KERNEL_OK")
</pallas_src>

<mosaic_0001>
module attributes {stable_mosaic.version = 11 : i64} {
  func.func @bsm_loss_kernel(%arg0: i32, %arg1: memref<32x128xf32, #tpu.memory_space<vmem>>, %arg2: memref<32x1xi32, #tpu.memory_space<vmem>>, %arg3: memref<32x1xf32, #tpu.memory_space<vmem>>, %arg4: memref<32x1xf32, #tpu.memory_space<vmem>>, %arg5: memref<32x1xf32, #tpu.memory_space<vmem>>, %arg6: memref<32x1xf32, #tpu.memory_space<vmem>>) attributes {dimension_semantics = [#tpu.dimension_semantics<parallel>], iteration_bounds = array<i64: 4>, scalar_prefetch = 0 : i64, scratch_operands = 0 : i64, tpu.core_type = #tpu.core_type<tc>, window_params = [{transform_indices = @transform_0, window_bounds = array<i64: 32, 128>}, {transform_indices = @transform_1, window_bounds = array<i64: 32, 1>}, {transform_indices = @transform_2, window_bounds = array<i64: 32, 1>}, {transform_indices = @transform_3, window_bounds = array<i64: 32, 1>}, {transform_indices = @transform_4, window_bounds = array<i64: 32, 1>}, {transform_indices = @transform_5, window_bounds = array<i64: 32, 1>}]} {
    %c0 = arith.constant 0 : index
    %c0_0 = arith.constant 0 : index
    %0 = vector.load %arg1[%c0, %c0_0] : memref<32x128xf32, #tpu.memory_space<vmem>>, vector<32x128xf32>
    %1 = tpu.iota {dimensions = array<i32: 1>} : vector<32x128xi32>
    %c0_1 = arith.constant 0 : index
    %c0_2 = arith.constant 0 : index
    %2 = vector.load %arg2[%c0_1, %c0_2] : memref<32x1xi32, #tpu.memory_space<vmem>>, vector<32x1xi32>
    %3 = vector.broadcast %2 : vector<32x1xi32> to vector<32x128xi32>
    %4 = arith.cmpi eq, %3, %1 : vector<32x128xi32>
    %cst = arith.constant 0.000000e+00 : f32
    %5 = vector.broadcast %cst : f32 to vector<32x128xf32>
    %6 = arith.select %4, %0, %5 : vector<32x128xi1>, vector<32x128xf32>
    %cst_3 = arith.constant dense<0.000000e+00> : vector<32xf32>
    %7 = vector.multi_reduction <add>, %6, %cst_3 [1] : vector<32x128xf32> to vector<32xf32>
    %8 = vector.shape_cast %7 : vector<32xf32> to vector<32x1xf32>
    %c0_4 = arith.constant 0 : index
    %c0_5 = arith.constant 0 : index
    %9 = vector.load %arg3[%c0_4, %c0_5] : memref<32x1xf32, #tpu.memory_space<vmem>>, vector<32x1xf32>
    %10 = arith.mulf %9, %8 : vector<32x1xf32>
    %c0_6 = arith.constant 0 : index
    %c0_7 = arith.constant 0 : index
    %11 = vector.load %arg4[%c0_6, %c0_7] : memref<32x1xf32, #tpu.memory_space<vmem>>, vector<32x1xf32>
    %12 = arith.subf %10, %11 : vector<32x1xf32>
    %c0_8 = arith.constant 0 : index
    %c0_9 = arith.constant 0 : index
    %13 = vector.load %arg5[%c0_8, %c0_9] : memref<32x1xf32, #tpu.memory_space<vmem>>, vector<32x1xf32>
    tpu.vector_store %arg5[%c0_8, %c0_9], %12 {strides = array<i32>} : memref<32x1xf32, #tpu.memory_space<vmem>>, vector<32x1xf32>,
    %14 = vector.shape_cast %0 : vector<32x128xf32> to vector<1x32x128xf32>
    %cst_10 = arith.constant dense<0xFF800000> : vector<1xf32>
    %15 = vector.multi_reduction <maximumf>, %14, %cst_10 [1, 2] : vector<1x32x128xf32> to vector<1xf32>
    %16 = vector.shape_cast %15 : vector<1xf32> to vector<1x1x1xf32>
    %17 = vector.extract %16[0, 0, 0] : f32 from vector<1x1x1xf32>
    %18 = vector.broadcast %17 : f32 to vector<32x1xf32>
    %c0_11 = arith.constant 0 : index
    %c0_12 = arith.constant 0 : index
    %19 = vector.load %arg6[%c0_11, %c0_12] : memref<32x1xf32, #tpu.memory_space<vmem>>, vector<32x1xf32>
    tpu.vector_store %arg6[%c0_11, %c0_12], %18 {strides = array<i32>} : memref<32x1xf32, #tpu.memory_space<vmem>>, vector<32x1xf32>,
    return
  }
  func.func @transform_0(%arg0: i32) -> (i32, i32) {
    %c0_i32 = arith.constant 0 : i32
    %c0_i32_0 = arith.constant 0 : i32
    return %arg0, %c0_i32 : i32, i32
  }
  func.func @transform_1(%arg0: i32) -> (i32, i32) {
    %c0_i32 = arith.constant 0 : i32
    %c0_i32_0 = arith.constant 0 : i32
    return %arg0, %c0_i32 : i32, i32
  }
  func.func @transform_2(%arg0: i32) -> (i32, i32) {
    %c0_i32 = arith.constant 0 : i32
    %c0_i32_0 = arith.constant 0 : i32
    return %arg0, %c0_i32 : i32, i32
  }
  func.func @transform_3(%arg0: i32) -> (i32, i32) {
    %c0_i32 = arith.constant 0 : i32
    %c0_i32_0 = arith.constant 0 : i32
    return %arg0, %c0_i32 : i32, i32
  }
  func.func @transform_4(%arg0: i32) -> (i32, i32) {
    %c0_i32 = arith.constant 0 : i32
    %c0_i32_0 = arith.constant 0 : i32
    return %arg0, %c0_i32 : i32, i32
  }
  func.func @transform_5(%arg0: i32) -> (i32, i32) {
    %c0_i32 = arith.constant 0 : i32
    %c0_i32_0 = arith.constant 0 : i32
    return %arg0, %c0_i32 : i32, i32
  }
}

</mosaic_0001>

<llo_original>
// kernel: tpu_custom_call.1
$region0: #{tpu_custom_call.1}
  #allocation0 [shape = 'u32[]', space=smem, size = 0x4, offset = 0x4, fixed_abs, tag = 'smem constant byte address 0x4 - core index']
  #allocation1 [shape = 'u32[72,128]{1,0:T(1,128)}', space=vmem, size = 0x9000, scoped, tag = 'internal scratch']
  %s0 = inlined_call_operand.vmem [shape: f32[128,128], index: 0, kind: input, shape index: {}]
  %s1 = inlined_call_operand.vmem [shape: s32[128,1], index: 1, kind: input, shape index: {}]
  %s2 = inlined_call_operand.vmem [shape: f32[128,1], index: 2, kind: input, shape index: {}]
  %s3 = inlined_call_operand.vmem [shape: f32[128,1], index: 3, kind: input, shape index: {}]
  %s4 = inlined_call_operand.vmem [shape: f32[128,1], index: 4, kind: output, shape index: {0}]
  %s5 = inlined_call_operand.vmem [shape: f32[128,1], index: 5, kind: output, shape index: {1}]
  %6 = xla_tuple %s4, %s5
  %s7 = sld [smem:[#allocation0]]
  $region57: #{tpu_custom_call.1} parent=0
    _
  %s9 = ssub.s32 1, %s7
  %s10 = scalar_select 0, %s9, %s7
  loop: start=0, step=1, limit=6
  $region2: #{tpu_custom_call.1} parent=0 // loop_pre_header
    _
  $region3: #{tpu_custom_call.1} parent=0 // loop_header
    %s12 = sphi 0, %s16
    %p13 = scmp.ge.s32.totalorder %s12, 6
    %s22 = sphi 0, %s24
    %s25 = sphi 0, %s22
    %s26 = sphi 0, %s25
    %s42 = sphi 0, %s26
    %s48 = sphi 0, %s50
    %s51 = sphi 0, %s48
    %s52 = sphi 0, %s51
    %s68 = sphi 0, %s52
    %s74 = sphi 0, %s76
    %s77 = sphi 0, %s74
    %s78 = sphi 0, %s77
    %s94 = sphi 0, %s78
    %s100 = sphi 0, %s102
    %s103 = sphi 0, %s100
    %s104 = sphi 0, %s103
    %s120 = sphi 0, %s104
    %s126 = sphi 0, %s128
    %s129 = sphi 0, %s126
    %s130 = sphi 0, %s129
    %s146 = sphi 0, %s130
    %s152 = sphi 0, %s154
    %s155 = sphi 0, %s152
    %s156 = sphi 0, %s155
    %s172 = sphi 0, %s156
  $region4: #{tpu_custom_call.1} parent=0 // loop_header_branch
    %15 = sbr.rel (%p13) target = $region8
  $region5: #{tpu_custom_call.1} parent=0 // loop_body
    %s17 = ssub.s32 %s12, 1
    %s18 = ssub.s32 %s12, 2
    %s19 = sadd.s32 %s12, 1
    %s20 = ssub.s32 %s12, %s19
    %p21 = scmp.eq.s32.totalorder %s20, 0
    %s23 = sadd.s32 %s22, 1
    %s24 = scalar_select %p21, %s22, %s23
    %p27 = pneg %p21
    %p28 = scmp.eq.s32.totalorder %s12, 3
    %p29 = por %p27, %p28
    %p30 = scmp.ne.s32.totalorder %s22, %s25
    %p31 = scmp.eq.s32.totalorder %s12, 0
    %p32 = por %p30, %p31
    %p33 = scmp.ne.s32.totalorder %s22, %s25
    %p34 = scmp.eq.s32.totalorder %s17, 3
    %p35 = por %p33, %p34
    %p36 = scmp.ne.s32.totalorder %s25, %s26
    %p37 = scmp.eq.s32.totalorder %s17, 0
    %p38 = por %p36, %p37
    %p39 = scmp.ne.s32.totalorder %s25, %s26
    %p40 = scmp.eq.s32.totalorder %s18, 3
    %p41 = por %p39, %p40
    %p43 = scmp.ne.s32.totalorder %s26, %s42
    %p44 = scmp.eq.s32.totalorder %s18, 0
    %p45 = por %p43, %p44
    %s46 = ssub.s32 %s12, %s19
    %p47 = scmp.eq.s32.totalorder %s46, 0
    %s49 = sadd.s32 %s48, 1
    %s50 = scalar_select %p47, %s48, %s49
    %p53 = pneg %p47
    %p54 = scmp.eq.s32.totalorder %s12, 3
    %p55 = por %p53, %p54
    %p56 = scmp.ne.s32.totalorder %s48, %s51
    %p57 = scmp.eq.s32.totalorder %s12, 0
    %p58 = por %p56, %p57
    %p59 = scmp.ne.s32.totalorder %s48, %s51
    %p60 = scmp.eq.s32.totalorder %s17, 3
    %p61 = por %p59, %p60
    %p62 = scmp.ne.s32.totalorder %s51, %s52
    %p63 = scmp.eq.s32.totalorder %s17, 0
    %p64 = por %p62, %p63
    %p65 = scmp.ne.s32.totalorder %s51, %s52
    %p66 = scmp.eq.s32.totalorder %s18, 3
    %p67 = por %p65, %p66
    %p69 = scmp.ne.s32.totalorder %s52, %s68
    %p70 = scmp.eq.s32.totalorder %s18, 0
    %p71 = por %p69, %p70
    %s72 = ssub.s32 %s12, %s19
    %p73 = scmp.eq.s32.totalorder %s72, 0
    %s75 = sadd.s32 %s74, 1
    %s76 = scalar_select %p73, %s74, %s75
    %p79 = pneg %p73
    %p80 = scmp.eq.s32.totalorder %s12, 3
    %p81 = por %p79, %p80
    %p82 = scmp.ne.s32.totalorder %s74, %s77
    %p83 = scmp.eq.s32.totalorder %s12, 0
    %p84 = por %p82, %p83
    %p85 = scmp.ne.s32.totalorder %s74, %s77
    %p86 = scmp.eq.s32.totalorder %s17, 3
    %p87 = por %p85, %p86
    %p88 = scmp.ne.s32.totalorder %s77, %s78
    %p89 = scmp.eq.s32.totalorder %s17, 0
    %p90 = por %p88, %p89
    %p91 = scmp.ne.s32.totalorder %s77, %s78
    %p92 = scmp.eq.s32.totalorder %s18, 3
    %p93 = por %p91, %p92
    %p95 = scmp.ne.s32.totalorder %s78, %s94
    %p96 = scmp.eq.s32.totalorder %s18, 0
    %p97 = por %p95, %p96
    %s98 = ssub.s32 %s12, %s19
    %p99 = scmp.eq.s32.totalorder %s98, 0
    %s101 = sadd.s32 %s100, 1
    %s102 = scalar_select %p99, %s100, %s101
    %p105 = pneg %p99
    %p106 = scmp.eq.s32.totalorder %s12, 3
    %p107 = por %p105, %p106
    %p108 = scmp.ne.s32.totalorder %s100, %s103
    %p109 = scmp.eq.s32.totalorder %s12, 0
    %p110 = por %p108, %p109
    %p111 = scmp.ne.s32.totalorder %s100, %s103
    %p112 = scmp.eq.s32.totalorder %s17, 3
    %p113 = por %p111, %p112
    %p114 = scmp.ne.s32.totalorder %s103, %s104
    %p115 = scmp.eq.s32.totalorder %s17, 0
    %p116 = por %p114, %p115
    %p117 = scmp.ne.s32.totalorder %s103, %s104
    %p118 = scmp.eq.s32.totalorder %s18, 3
    %p119 = por %p117, %p118
    %p121 = scmp.ne.s32.totalorder %s104, %s120
    %p122 = scmp.eq.s32.totalorder %s18, 0
    %p123 = por %p121, %p122
    %s124 = ssub.s32 %s12, %s19
    %p125 = scmp.eq.s32.totalorder %s124, 0
    %s127 = sadd.s32 %s126, 1
    %s128 = scalar_select %p125, %s126, %s127
    %p131 = pneg %p125
    %p132 = scmp.eq.s32.totalorder %s12, 3
    %p133 = por %p131, %p132
    %p134 = scmp.ne.s32.totalorder %s126, %s129
    %p135 = scmp.eq.s32.totalorder %s12, 0
    %p136 = por %p134, %p135
    %p137 = scmp.ne.s32.totalorder %s126, %s129
    %p138 = scmp.eq.s32.totalorder %s17, 3
    %p139 = por %p137, %p138
    %p140 = scmp.ne.s32.totalorder %s129, %s130
    %p141 = scmp.eq.s32.totalorder %s17, 0
    %p142 = por %p140, %p141
    %p143 = scmp.ne.s32.totalorder %s129, %s130
    %p144 = scmp.eq.s32.totalorder %s18, 3
    %p145 = por %p143, %p144
    %p147 = scmp.ne.s32.totalorder %s130, %s146
    %p148 = scmp.eq.s32.totalorder %s18, 0
    %p149 = por %p147, %p148
    %s150 = ssub.s32 %s12, %s19
    %p151 = scmp.eq.s32.totalorder %s150, 0
    %s153 = sadd.s32 %s152, 1
    %s154 = scalar_select %p151, %s152, %s153
    %p157 = pneg %p151
    %p158 = scmp.eq.s32.totalorder %s12, 3
    %p159 = por %p157, %p158
    %p160 = scmp.ne.s32.totalorder %s152, %s155
    %p161 = scmp.eq.s32.totalorder %s12, 0
    %p162 = por %p160, %p161
    %p163 = scmp.ne.s32.totalorder %s152, %s155
    %p164 = scmp.eq.s32.totalorder %s17, 3
    %p165 = por %p163, %p164
    %p166 = scmp.ne.s32.totalorder %s155, %s156
    %p167 = scmp.eq.s32.totalorder %s17, 0
    %p168 = por %p166, %p167
    %p169 = scmp.ne.s32.totalorder %s155, %s156
    %p170 = scmp.eq.s32.totalorder %s18, 3
    %p171 = por %p169, %p170
    %p173 = scmp.ne.s32.totalorder %s156, %s172
    %p174 = scmp.eq.s32.totalorder %s18, 0
    %p175 = por %p173, %p174
    %p176 = scmp.le.s32.totalorder 1, %s12
    %p177 = scmp.lt.s32.totalorder %s12, 5
    %p178 = pnand %p176, %p177
    %p179 = pneg %p178
    // Predicated region
    $region9: #{tpu_custom_call.1} parent=5 // pred_check
      _
    $region10: #{tpu_custom_call.1} parent=5 // pred_check_branch
      %181 = sbr.rel (%p178) target = $region12
    $region11: #{tpu_custom_call.1} parent=5 // pred_region
      %s182 = ssub.s32 %s12, 1
    $region12: #{tpu_custom_call.1} parent=5 // pred_fallthru
      _
    %p183 = scmp.lt.s32.totalorder %s12, 4
    // Predicated region
    $region13: #{tpu_custom_call.1} parent=5 // pred_check
      %p184 = pneg %p183
    $region14: #{tpu_custom_call.1} parent=5 // pred_check_branch
      %186 = sbr.rel (%p184) target = $region16
    $region15: #{tpu_custom_call.1} parent=5 // pred_region
      // Predicated region
      $region17: #{tpu_custom_call.1} parent=15 // pred_check
        %p187 = pneg %p32
      $region18: #{tpu_custom_call.1} parent=15 // pred_check_branch
        %189 = sbr.rel (%p187) target = $region20
      $region19: #{tpu_custom_call.1} parent=15 // pred_region
        %s190 = smul.u32 4, %s12
        %p191 = scmp.lt.s32.totalorder %s190, 15
        %s192 = scalar_select %p191, %s190, 15
        %s193 = smul.addr %s192, 8
        %s194 = scalar_lea.vmem %s0, %s193
        %s195 = smul.u32 4, %s12
      $region20: #{tpu_custom_call.1} parent=15 // pred_fallthru
        _
      // Predicated region
      $region21: #{tpu_custom_call.1} parent=15 // pred_check
        %p196 = pneg %p58
      $region22: #{tpu_custom_call.1} parent=15 // pred_check_branch
        %198 = sbr.rel (%p196) target = $region24
      $region23: #{tpu_custom_call.1} parent=15 // pred_region
        %s199 = smul.u32 4, %s12
        %p200 = scmp.lt.s32.totalorder %s199, 15
        %s201 = scalar_select %p200, %s199, 15
        %s202 = smul.addr %s201, 8
        %s203 = scalar_lea.vmem %s1, %s202
        %s204 = smul.u32 4, %s12
      $region24: #{tpu_custom_call.1} parent=15 // pred_fallthru
        _
      // Predicated region
      $region25: #{tpu_custom_call.1} parent=15 // pred_check
        %p205 = pneg %p84
      $region26: #{tpu_custom_call.1} parent=15 // pred_check_branch
        %207 = sbr.rel (%p205) target = $region28
      $region27: #{tpu_custom_call.1} parent=15 // pred_region
        %s208 = smul.u32 4, %s12
        %p209 = scmp.lt.s32.totalorder %s208, 15
        %s210 = scalar_select %p209, %s208, 15
        %s211 = smul.addr %s210, 8
        %s212 = scalar_lea.vmem %s2, %s211
        %s213 = smul.u32 4, %s12
      $region28: #{tpu_custom_call.1} parent=15 // pred_fallthru
        _
      // Predicated region
      $region29: #{tpu_custom_call.1} parent=15 // pred_check
        %p214 = pneg %p110
      $region30: #{tpu_custom_call.1} parent=15 // pred_check_branch
        %216 = sbr.rel (%p214) target = $region32
      $region31: #{tpu_custom_call.1} parent=15 // pred_region
        %s217 = smul.u32 4, %s12
        %p218 = scmp.lt.s32.totalorder %s217, 15
        %s219 = scalar_select %p218, %s217, 15
        %s220 = smul.addr %s219, 8
        %s221 = scalar_lea.vmem %s3, %s220
        %s222 = smul.u32 4, %s12
      $region32: #{tpu_custom_call.1} parent=15 // pred_fallthru
        _
    $region16: #{tpu_custom_call.1} parent=5 // pred_fallthru
      _
    %p223 = scmp.le.s32.totalorder 1, %s12
    %p224 = scmp.lt.s32.totalorder %s12, 5
    %p225 = pnand %p223, %p224
    %p226 = pneg %p225
    // Predicated region
    $region33: #{tpu_custom_call.1} parent=5 // pred_check
      _
    $region34: #{tpu_custom_call.1} parent=5 // pred_check_branch
      %228 = sbr.rel (%p225) target = $region36
    $region35: #{tpu_custom_call.1} parent=5 // pred_region
      %s229 = ssub.s32 %s12, 1
      %s230 = smul.u32 4, %s17
      %p231 = scmp.lt.s32.totalorder %s230, 15
      %s232 = scalar_select %p231, %s230, 15
      %s233 = smul.addr %s232, 8
      %s234 = scalar_lea.vmem %s0, %s233
      %p235 = pneg %p38
      %p236 = pneg %p35
      %s237 = smul.u32 4, %s17
      %p238 = scmp.lt.s32.totalorder %s237, 15
      %s239 = scalar_select %p238, %s237, 15
      %s240 = smul.addr %s239, 8
      %s241 = scalar_lea.vmem %s1, %s240
      %p242 = pneg %p64
      %p243 = pneg %p61
      %s244 = smul.u32 4, %s17
      %p245 = scmp.lt.s32.totalorder %s244, 15
      %s246 = scalar_select %p245, %s244, 15
      %s247 = smul.addr %s246, 8
      %s248 = scalar_lea.vmem %s2, %s247
      %p249 = pneg %p90
      %p250 = pneg %p87
      %s251 = smul.u32 4, %s17
      %p252 = scmp.lt.s32.totalorder %s251, 15
      %s253 = scalar_select %p252, %s251, 15
      %s254 = smul.addr %s253, 8
      %s255 = scalar_lea.vmem %s3, %s254
      %p256 = pneg %p116
      %p257 = pneg %p113
      %p258 = pneg %p142
      %p259 = pneg %p139
      %s260 = smul.u32 4, %s17
      %p261 = scmp.lt.s32.totalorder %s260, 15
      %s262 = scalar_select %p261, %s260, 15
      %s263 = smul.addr %s262, 8
      %s264 = scalar_lea.vmem %s4, %s263
      %p265 = pneg %p168
      %p266 = pneg %p165
      %s267 = smul.u32 4, %s17
      %p268 = scmp.lt.s32.totalorder %s267, 15
      %s269 = scalar_select %p268, %s267, 15
      %s270 = smul.addr %s269, 8
      %s271 = scalar_lea.vmem %s5, %s270
      %s272 = smul.u32 4, %s17
      %p273 = scmp.lt.s32.totalorder %s272, 15
      %s274 = scalar_select %p273, %s272, 15
      %s275 = smul.addr %s274, 8
      %s276 = scalar_lea.vmem %s0, %s275
      %s277 = smul.u32 4, %s17
      %s278 = smul.u32 4, %s17
      %p279 = scmp.lt.s32.totalorder %s278, 15
      %s280 = scalar_select %p279, %s278, 15
      %s281 = smul.addr %s280, 8
      %s282 = scalar_lea.vmem %s1, %s281
      %s283 = smul.u32 4, %s17
      %s284 = smul.u32 4, %s17
      %p285 = scmp.lt.s32.totalorder %s284, 15
      %s286 = scalar_select %p285, %s284, 15
      %s287 = smul.addr %s286, 8
      %s288 = scalar_lea.vmem %s2, %s287
      %s289 = smul.u32 4, %s17
      %s290 = smul.u32 4, %s17
      %p291 = scmp.lt.s32.totalorder %s290, 15
      %s292 = scalar_select %p291, %s290, 15
      %s293 = smul.addr %s292, 8
      %s294 = scalar_lea.vmem %s3, %s293
      %s295 = smul.u32 4, %s17
      %s296 = smul.u32 4, %s17
      %p297 = scmp.lt.s32.totalorder %s296, 15
      %s298 = scalar_select %p297, %s296, 15
      %s299 = smul.addr %s298, 8
      %s300 = scalar_lea.vmem %s4, %s299
      %s301 = smul.u32 4, %s17
      %s302 = smul.u32 4, %s17
      %p303 = scmp.lt.s32.totalorder %s302, 15
      %s304 = scalar_select %p303, %s302, 15
      %s305 = smul.addr %s304, 8
      %s306 = scalar_lea.vmem %s5, %s305
      %s307 = smul.u32 4, %s17
      %v308 = vld [vmem:[%s276] sm:$0xff]
      %v309 = vld [vmem:[%s276 + $0x8] sm:$0xff]
      %v310 = vld [vmem:[%s276 + $0x10] sm:$0xff]
      %v311 = vld [vmem:[%s276 + $0x18] sm:$0xff]
      %v312 = vlaneseq
      %v313 = vand.u32 %v312, 127
      %v314 = vld [vmem:[%s282] sm:$0xff]
      %v315 = vld [vmem:[%s282 + $0x8] sm:$0xff]
      %v316 = vld [vmem:[%s282 + $0x10] sm:$0xff]
      %v317 = vld [vmem:[%s282 + $0x18] sm:$0xff]
      %318 = vset.pattern.permute.xlu0 0
      %319 = vperm.xlu0 %318, %v314
      %v320 = vpop.permute.xlu0 %319
      %321 = vset.pattern.permute.xlu0 0
      %322 = vperm.xlu0 %321, %v315
      %v323 = vpop.permute.xlu0 %322
      %324 = vset.pattern.permute.xlu0 0
      %325 = vperm.xlu0 %324, %v316
      %v326 = vpop.permute.xlu0 %325
      %327 = vset.pattern.permute.xlu0 0
      %328 = vperm.xlu0 %327, %v317
      %v329 = vpop.permute.xlu0 %328
      %vm330 = vcmp.eq.s32.totalorder %v320, %v313
      %vm331 = vcmp.eq.s32.totalorder %v323, %v313
      %vm332 = vcmp.eq.s32.totalorder %v326, %v313
      %vm333 = vcmp.eq.s32.totalorder %v329, %v313
      %v334 = vsel %vm330, %v308, 0.0
      %v335 = vsel %vm331, %v309, 0.0
      %v336 = vsel %vm332, %v310, 0.0
      %v337 = vsel %vm333, %v311, 0.0
      %338 = vadd.xlane.f32.xlu0 %v334
      %v339 = vpop.xlane.xlu0 %338
      %340 = vadd.xlane.f32.xlu0 %v335
      %v341 = vpop.xlane.xlu0 %340
      %342 = vadd.xlane.f32.xlu0 %v336
      %v343 = vpop.xlane.xlu0 %342
      %344 = vadd.xlane.f32.xlu0 %v337
      %v345 = vpop.xlane.xlu0 %344
      %v346 = vld [vmem:[%s288] sm:$0xff]
      %v347 = vld [vmem:[%s288 + $0x8] sm:$0xff]
      %v348 = vld [vmem:[%s288 + $0x10] sm:$0xff]
      %v349 = vld [vmem:[%s288 + $0x18] sm:$0xff]
      %v350 = vmul.f32 %v346, %v339
      %v351 = vmul.f32 %v347, %v341
      %v352 = vmul.f32 %v348, %v343
      %v353 = vmul.f32 %v349, %v345
      %v354 = vld [vmem:[%s294] sm:$0xff]
      %v355 = vld [vmem:[%s294 + $0x8] sm:$0xff]
      %v356 = vld [vmem:[%s294 + $0x10] sm:$0xff]
      %v357 = vld [vmem:[%s294 + $0x18] sm:$0xff]
      %v358 = vsub.f32 %v350, %v354
      %v359 = vsub.f32 %v351, %v355
      %v360 = vsub.f32 %v352, %v356
      %v361 = vsub.f32 %v353, %v357
      %vm362 = vcmask 7168
      %363 = vst.msk [vmem:[%s300] sm:$0xff] %vm362, %v358
      %364 = vst.msk [vmem:[%s300 + $0x8] sm:$0xff] %vm362, %v359
      %365 = vst.msk [vmem:[%s300 + $0x10] sm:$0xff] %vm362, %v360
      %366 = vst.msk [vmem:[%s300 + $0x18] sm:$0xff] %vm362, %v361
      %v367 = vmax.f32 %v308, %v309
      %v368 = vmax.f32 %v310, %v311
      %v369 = vmax.f32 %v367, %v368
      %370 = vmax.xlane.f32.xlu0 %v369
      %v371 = vpop.xlane.xlu0 %370
      %v372 = vrot.slane %v371, 4
      %v373 = vmax.f32 %v371, %v372
      %v374 = vrot.slane %v373, 2
      %v375 = vmax.f32 %v373, %v374
      %v376 = vrot.slane %v375, 1
      %v377 = vmax.f32 %v375, %v376
      %s378 = vtos %v377
      %v379 = vstv %s378
      %380 = vst.msk [vmem:[%s306] sm:$0xff] %vm362, %v379
      %381 = vst.msk [vmem:[%s306 + $0x8] sm:$0xff] %vm362, %v379
      %382 = vst.msk [vmem:[%s306 + $0x10] sm:$0xff] %vm362, %v379
      %383 = vst.msk [vmem:[%s306 + $0x18] sm:$0xff] %vm362, %v379
      %s384 = smul.u32 4, %s17
      %p385 = scmp.lt.s32.totalorder %s384, 15
      %s386 = scalar_select %p385, %s384, 15
      %s387 = smul.addr %s386, 8
      %s388 = scalar_lea.vmem %s4, %s387
      %s389 = smul.u32 4, %s17
      %p390 = scmp.lt.s32.totalorder %s389, 15
      %s391 = scalar_select %p390, %s389, 15
      %s392 = smul.addr %s391, 8
      %s393 = scalar_lea.vmem %s5, %s392
      // Predicated region
      $region37: #{tpu_custom_call.1} parent=35 // pred_check
        %p394 = pneg %p139
      $region38: #{tpu_custom_call.1} parent=35 // pred_check_branch
        %396 = sbr.rel (%p394) target = $region40
      $region39: #{tpu_custom_call.1} parent=35 // pred_region
        %s397 = smul.u32 4, %s17
      $region40: #{tpu_custom_call.1} parent=35 // pred_fallthru
        _
      // Predicated region
      $region41: #{tpu_custom_call.1} parent=35 // pred_check
        %p398 = pneg %p165
      $region42: #{tpu_custom_call.1} parent=35 // pred_check_branch
        %400 = sbr.rel (%p398) target = $region44
      $region43: #{tpu_custom_call.1} parent=35 // pred_region
        %s401 = smul.u32 4, %s17
      $region44: #{tpu_custom_call.1} parent=35 // pred_fallthru
        _
    $region36: #{tpu_custom_call.1} parent=5 // pred_fallthru
      _
    %p402 = scmp.le.s32.totalorder 2, %s12
    // Predicated region
    $region45: #{tpu_custom_call.1} parent=5 // pred_check
      %p403 = pneg %p402
    $region46: #{tpu_custom_call.1} parent=5 // pred_check_branch
      %405 = sbr.rel (%p403) target = $region48
    $region47: #{tpu_custom_call.1} parent=5 // pred_region
      %s406 = ssub.s32 %s12, 2
      // Predicated region
      $region49: #{tpu_custom_call.1} parent=47 // pred_check
        %p407 = pneg %p145
      $region50: #{tpu_custom_call.1} parent=47 // pred_check_branch
        %409 = sbr.rel (%p407) target = $region52
      $region51: #{tpu_custom_call.1} parent=47 // pred_region
        %s410 = smul.u32 4, %s18
        %p411 = scmp.lt.s32.totalorder %s410, 15
        %s412 = scalar_select %p411, %s410, 15
        %s413 = smul.addr %s412, 8
        %s414 = scalar_lea.vmem %s4, %s413
      $region52: #{tpu_custom_call.1} parent=47 // pred_fallthru
        _
      // Predicated region
      $region53: #{tpu_custom_call.1} parent=47 // pred_check
        %p415 = pneg %p171
      $region54: #{tpu_custom_call.1} parent=47 // pred_check_branch
        %417 = sbr.rel (%p415) target = $region56
      $region55: #{tpu_custom_call.1} parent=47 // pred_region
        %s418 = smul.u32 4, %s18
        %p419 = scmp.lt.s32.totalorder %s418, 15
        %s420 = scalar_select %p419, %s418, 15
        %s421 = smul.addr %s420, 8
        %s422 = scalar_lea.vmem %s5, %s421
      $region56: #{tpu_custom_call.1} parent=47 // pred_fallthru
        _
    $region48: #{tpu_custom_call.1} parent=5 // pred_fallthru
      _
  $region6: #{tpu_custom_call.1} parent=0 // loop_footer
    %s16 = sadd.s32 1, %s12
  $region7: #{tpu_custom_call.1} parent=0 // loop_footer_branch
    %11 = sbr.rel target = $region3
  $region8: #{tpu_custom_call.1} parent=0 // loop_exit
    _

</llo_original>
